<compile_context>
chip_gen: v7x
topology: tpu7x:2x2x1
jax: 0.10.0
libtpu: 0.0.40
codegen_flags: <defaults>
</compile_context>

<pallas_src>
import functools

import jax
import jax.numpy as jnp
from jax.experimental import pallas as pl
from jax.experimental.pallas import tpu as pltpu

_DEFAULT_TILE_BYTES = 4 * 1024 * 1024   # per-tile budget (input tile == output tile bytes)
_VMEM_LIMIT_BYTES = 32 * 1024 * 1024    # 2 buffers x (in + out) x 4 MiB = 16 MiB << 32 MiB


def _shuffle_kernel(x_ref, o_ref, *, groups, hw):
    """x_ref: (nb, g, cb, hw) tile of the grouped input view.
    o_ref: (nb, cb, g*hw) tile of the shuffled output view.

    out[n, i*g + j, s] = x[n, j*(C//g) + i, s] becomes, per group j,
    o[:, :, j*hw:(j+1)*hw] = x[:, j] — g full-tile stores, dense and
    lane-aligned when hw % 128 == 0 (no per-channel unrolled loop).
    """
    for j in range(groups):            # static; groups == 2 in ShuffleNetV2
        o_ref[:, :, j * hw:(j + 1) * hw] = x_ref[:, j]


def _choose_blocks(N, cpg, g, hw, dtype, max_tile_bytes):
    """Pick (batch_block nb, channel_block cb).

    cb | cpg and is a multiple of 8 sublanes (dtype-packed multiple preferred:
    16 for bf16, 32 for int8) or the full cpg dim.  Blocks are sized up to the
    byte budget; when the whole per-image slab fits, several images are packed
    per grid step so per-step DMA size approaches the budget and the ~0.35 us
    per-step overhead is amortized.
    """
    itemsize = jnp.dtype(dtype).itemsize
    sub = max(8, 32 // max(1, itemsize))          # f32 -> 8, bf16 -> 16, int8 -> 32
    per_channel_bytes = g * hw * itemsize         # one cpg-channel (all g groups), one image

    divisors = [d for d in range(1, cpg + 1) if cpg % d == 0]
    legal = sorted(set([d for d in divisors if d % 8 == 0] + [cpg]))
    fits = [d for d in legal if d * per_channel_bytes <= max_tile_bytes] or [min(legal)]
    packed = [d for d in fits if d % sub == 0 or d == cpg]
    cb = max(packed) if packed else max(fits)

    # Batch blocking: pack images per step when the per-image slab is small.
    img_bytes = cb * per_channel_bytes
    n_divs = [d for d in range(1, N + 1) if N % d == 0]
    nfits = [d for d in n_divs if d * img_bytes <= max_tile_bytes]
    nb = max(nfits) if nfits else 1

    # v7x has 2 TensorCores: split a (1, 1) grid when possible so the
    # "parallel" axes can actually shard across both cores.
    if (N // nb) * (cpg // cb) < 2:
        if N > 1:
            nb = max(d for d in n_divs if d < N)
        else:
            smaller = [d for d in legal if d < cb]
            if smaller:
                cb = max(smaller)
    return nb, cb


def channel_shuffle(x, groups=2, max_tile_bytes=_DEFAULT_TILE_BYTES):
    """Pallas implementation of ShuffleBlock.forward for NCHW input."""
    N, C, H, W = x.shape
    g = groups
    assert C % g == 0, "channels must be divisible by groups"
    cpg = C // g
    hw = H * W
    itemsize = jnp.dtype(x.dtype).itemsize

    nb, cb = _choose_blocks(N, cpg, g, hw, x.dtype, max_tile_bytes)
    # Robustness (review): never hand Mosaic a second-to-last block dim that is
    # neither 8-aligned nor the full dimension.
    assert cb == cpg or cb % 8 == 0, (cb, cpg)
    assert N % nb == 0 and cpg % cb == 0

    n_bblocks = N // nb
    n_cblocks = cpg // cb

    # Free (metadata-only) reshape: (N, C, H, W) -> (N, g, C/g, H*W).
    x4 = x.reshape(N, g, cpg, hw)

    kernel = functools.partial(_shuffle_kernel, groups=g, hw=hw)

    out3 = pl.pallas_call(
        kernel,
        out_shape=jax.ShapeDtypeStruct((N, cpg, g * hw), x.dtype),
        grid_spec=pltpu.PrefetchScalarGridSpec(
            num_scalar_prefetch=0,
            grid=(n_bblocks, n_cblocks),
            in_specs=[
                pl.BlockSpec((nb, g, cb, hw), lambda b, c: (b, 0, c, 0)),
            ],
            out_specs=pl.BlockSpec((nb, cb, g * hw), lambda b, c: (b, c, 0)),
        ),
        compiler_params=pltpu.CompilerParams(
            dimension_semantics=("parallel", "parallel"),
            vmem_limit_bytes=_VMEM_LIMIT_BYTES),
        cost_estimate=pl.CostEstimate(
            flops=0, transcendentals=0,
            bytes_accessed=int(2 * N * C * hw * itemsize)),
    )(x4)

    # Free reshape back: (N, C/g, g*H*W) -> (N, C, H, W).
    return out3.reshape(N, C, H, W)


def channel_shuffle_ref(x, groups=2):
    """Pure-JAX reference mirroring the PyTorch view/permute/reshape."""
    N, C, H, W = x.shape
    g = groups
    return (x.reshape(N, g, C // g, H, W)
             .transpose(0, 2, 1, 3, 4)
             .reshape(N, C, H, W))


if __name__ == "__main__":
    key = jax.random.PRNGKey(0)
    k1, k2, k3, k4 = jax.random.split(key, 4)

    # hw = 256 (lane-aligned, dense-store fast path), tiny channel dim.
    x = jax.random.normal(k1, (2, 4, 16, 16), dtype=jnp.float32)
    out = jax.block_until_ready(channel_shuffle(x, groups=2))
    ref = channel_shuffle_ref(x, groups=2)
    assert out.shape == ref.shape and out.dtype == ref.dtype
    assert jnp.array_equal(out, ref), "Pallas channel shuffle mismatch (x)"

    # hw = 64 (< 128): full-channel single block per image, masked stores.
    y = jax.random.normal(k2, (2, 64, 8, 8), dtype=jnp.float32)
    out2 = jax.block_until_ready(channel_shuffle(y, groups=2))
    assert jnp.array_equal(out2, channel_shuffle_ref(y, groups=2)), "mismatch (y)"

    # Same tensor, artificially tiny tile budget: exercises the
    # multi-channel-block grid and its index maps.
    out2b = jax.block_until_ready(channel_shuffle(y, groups=2, max_tile_bytes=4096))
    assert jnp.array_equal(out2b, channel_shuffle_ref(y, groups=2)), "mismatch (y/small-tile)"

    # Batch-blocked path (2 images per grid step).
    z = jax.random.normal(k3, (4, 64, 8, 8), dtype=jnp.float32)
    out3 = jax.block_until_ready(channel_shuffle(z, groups=2))
    assert jnp.array_equal(out3, channel_shuffle_ref(z, groups=2)), "mismatch (z)"

    # bf16 (typical inference dtype): dtype-aware sublane multiple, aligned hw.
    w = jax.random.normal(k4, (2, 64, 16, 16), dtype=jnp.float32).astype(jnp.bfloat16)
    out4 = jax.block_until_ready(channel_shuffle(w, groups=2))
    assert jnp.array_equal(out4, channel_shuffle_ref(w, groups=2)), "mismatch (w/bf16)"

    print("KERNEL_OK")
</pallas_src>

<mosaic_0001>
module attributes {stable_mosaic.version = 11 : i64} {
  func.func @_shuffle_kernel(%arg0: i32, %arg1: i32, %arg2: memref<1x2x2x256xf32, #tpu.memory_space<vmem>>, %arg3: memref<1x2x512xf32, #tpu.memory_space<vmem>>) attributes {dimension_semantics = [#tpu.dimension_semantics<parallel>, #tpu.dimension_semantics<parallel>], iteration_bounds = array<i64: 2, 1>, scalar_prefetch = 0 : i64, scratch_operands = 0 : i64, tpu.core_type = #tpu.core_type<tc>, window_params = [{transform_indices = @transform_0, window_bounds = array<i64: 1, 2, 2, 256>}, {transform_indices = @transform_1, window_bounds = array<i64: 1, 2, 512>}]} {
    %c0 = arith.constant 0 : index
    %c0_0 = arith.constant 0 : index
    %c0_1 = arith.constant 0 : index
    %c0_2 = arith.constant 0 : index
    %0 = vector.load %arg2[%c0, %c0_0, %c0_1, %c0_2] : memref<1x2x2x256xf32, #tpu.memory_space<vmem>>, vector<1x1x2x256xf32>
    %1 = vector.shape_cast %0 : vector<1x1x2x256xf32> to vector<1x2x256xf32>
    %c0_3 = arith.constant 0 : index
    %c0_4 = arith.constant 0 : index
    %c0_5 = arith.constant 0 : index
    %2 = vector.load %arg3[%c0_3, %c0_4, %c0_5] : memref<1x2x512xf32, #tpu.memory_space<vmem>>, vector<1x2x256xf32>
    tpu.vector_store %arg3[%c0_3, %c0_4, %c0_5], %1 {strides = array<i32>} : memref<1x2x512xf32, #tpu.memory_space<vmem>>, vector<1x2x256xf32>,
    %c0_6 = arith.constant 0 : index
    %c1 = arith.constant 1 : index
    %c0_7 = arith.constant 0 : index
    %c0_8 = arith.constant 0 : index
    %3 = vector.load %arg2[%c0_6, %c1, %c0_7, %c0_8] : memref<1x2x2x256xf32, #tpu.memory_space<vmem>>, vector<1x1x2x256xf32>
    %4 = vector.shape_cast %3 : vector<1x1x2x256xf32> to vector<1x2x256xf32>
    %c0_9 = arith.constant 0 : index
    %c0_10 = arith.constant 0 : index
    %c256 = arith.constant 256 : index
    %5 = vector.load %arg3[%c0_9, %c0_10, %c256] : memref<1x2x512xf32, #tpu.memory_space<vmem>>, vector<1x2x256xf32>
    tpu.vector_store %arg3[%c0_9, %c0_10, %c256], %4 {strides = array<i32>} : memref<1x2x512xf32, #tpu.memory_space<vmem>>, vector<1x2x256xf32>,
    return
  }
  func.func @transform_0(%arg0: i32, %arg1: i32) -> (i32, i32, i32, i32) {
    %c0_i32 = arith.constant 0 : i32
    %c0_i32_0 = arith.constant 0 : i32
    %c0_i32_1 = arith.constant 0 : i32
    return %arg0, %c0_i32, %arg1, %c0_i32_0 : i32, i32, i32, i32
  }
  func.func @transform_1(%arg0: i32, %arg1: i32) -> (i32, i32, i32) {
    %c0_i32 = arith.constant 0 : i32
    %c0_i32_0 = arith.constant 0 : i32
    return %arg0, %arg1, %c0_i32 : i32, i32, i32
  }
}

</mosaic_0001>

<llo_original>
// kernel: tpu_custom_call.1
$region0: #{tpu_custom_call.1}
  #allocation0 [shape = 'u32[]', space=smem, size = 0x4, offset = 0x4, fixed_abs, tag = 'smem constant byte address 0x4 - core index']
  #allocation1 [shape = 'u32[144,128]{1,0:T(1,128)}', space=vmem, size = 0x12000, scoped, tag = 'internal scratch']
  %s0 = inlined_call_operand.hbm [shape: f32[2,2,2,256], index: 0, kind: input, shape index: {}]
  %s1 = inlined_call_operand.hbm [shape: f32[2,2,512], index: 1, kind: output, shape index: {}]
  %s2 = sld [smem:[#allocation0]]
  $region41: #{tpu_custom_call.1} parent=0
    _
  %s4 = ssub.s32 1, %s2
  %s5 = scalar_select 0, %s4, %s2
  $region1: #{tpu_custom_call.1} parent=0
    #allocation2 [shape = 'u8[8192]{0}', space=vmem, size = 0x2000, scoped, tag = 'input window, operand 0']
    #allocation3 [shape = 's32[2]{0}', space=sflag, size = 0x8, scoped, tag = 'scoped memory for tpu_custom_call.1']
    #allocation4 [shape = 's32[2]{0}', space=sflag, size = 0x8, scoped, tag = 'scoped memory for tpu_custom_call.1']
    #allocation5 [shape = 'u8[8192]{0}', space=vmem, size = 0x2000, scoped, tag = 'output window, operand 0']
    %6 = vsyncpa [#allocation3], 0
    %s7 = scalar_lea.sflag [#allocation3], 1
    %8 = vsyncpa %s7, 0
    %9 = vsyncpa [#allocation4], 0
    %s10 = scalar_lea.sflag [#allocation4], 1
    %11 = vsyncpa %s10, 0
    loop: start=0, step=1, limit=4
    $region2: #{tpu_custom_call.1} parent=1 // loop_pre_header
      _
    $region3: #{tpu_custom_call.1} parent=1 // loop_header
      %s13 = sphi 0, %s17
      %p14 = scmp.ge.s32.totalorder %s13, 4
      %s20 = sphi 0, %s32
      %s21 = sphi 0, %s28
      %s22 = sphi 0, %s20
      %s23 = sphi 0, %s21
      %s24 = sphi 0, %s22
      %s25 = sphi 0, %s23
      %s37 = sphi 0, %s39
      %s40 = sphi 0, %s37
      %s41 = sphi 0, %s40
      %s57 = sphi 0, %s41
      %s65 = sphi 0, %s67
      %s68 = sphi 0, %s65
      %s69 = sphi 0, %s68
      %s85 = sphi 0, %s69
    $region4: #{tpu_custom_call.1} parent=1 // loop_header_branch
      %16 = sbr.rel (%p14) target = $region8
    $region5: #{tpu_custom_call.1} parent=1 // loop_body
      %s18 = ssub.s32 %s13, 1
      %s19 = ssub.s32 %s13, 2
      %s26 = sadd.s32 1, %s21
      %p27 = scmp.ge.s32.totalorder %s26, 1
      %s28 = scalar_select %p27, 0, %s26
      %s29 = sadd.s32 1, %s20
      %s30 = scalar_select %p27, %s29, %s20
      %p31 = scmp.ge.s32.totalorder %s30, 2
      %s32 = scalar_select %p31, 0, %s30
      %s33 = ssub.s32 %s20, %s32
      %s34 = ssub.s32 %s21, %s28
      %s35 = sor.u32 %s33, %s34
      %p36 = scmp.eq.s32.totalorder %s35, 0
      %s38 = sadd.s32 %s37, 1
      %s39 = scalar_select %p36, %s37, %s38
      %p42 = pneg %p36
      %p43 = scmp.eq.s32.totalorder %s13, 1
      %p44 = por %p42, %p43
      %p45 = scmp.ne.s32.totalorder %s37, %s40
      %p46 = scmp.eq.s32.totalorder %s13, 0
      %p47 = por %p45, %p46
      %p48 = scmp.ne.s32.totalorder %s37, %s40
      %p49 = scmp.eq.s32.totalorder %s18, 1
      %p50 = por %p48, %p49
      %p51 = scmp.ne.s32.totalorder %s40, %s41
      %p52 = scmp.eq.s32.totalorder %s18, 0
      %p53 = por %p51, %p52
      %p54 = scmp.ne.s32.totalorder %s40, %s41
      %p55 = scmp.eq.s32.totalorder %s19, 1
      %p56 = por %p54, %p55
      %p58 = scmp.ne.s32.totalorder %s41, %s57
      %p59 = scmp.eq.s32.totalorder %s19, 0
      %p60 = por %p58, %p59
      %s61 = ssub.s32 %s20, %s32
      %s62 = ssub.s32 %s21, %s28
      %s63 = sor.u32 %s61, %s62
      %p64 = scmp.eq.s32.totalorder %s63, 0
      %s66 = sadd.s32 %s65, 1
      %s67 = scalar_select %p64, %s65, %s66
      %p70 = pneg %p64
      %p71 = scmp.eq.s32.totalorder %s13, 1
      %p72 = por %p70, %p71
      %p73 = scmp.ne.s32.totalorder %s65, %s68
      %p74 = scmp.eq.s32.totalorder %s13, 0
      %p75 = por %p73, %p74
      %p76 = scmp.ne.s32.totalorder %s65, %s68
      %p77 = scmp.eq.s32.totalorder %s18, 1
      %p78 = por %p76, %p77
      %p79 = scmp.ne.s32.totalorder %s68, %s69
      %p80 = scmp.eq.s32.totalorder %s18, 0
      %p81 = por %p79, %p80
      %p82 = scmp.ne.s32.totalorder %s68, %s69
      %p83 = scmp.eq.s32.totalorder %s19, 1
      %p84 = por %p82, %p83
      %p86 = scmp.ne.s32.totalorder %s69, %s85
      %p87 = scmp.eq.s32.totalorder %s19, 0
      %p88 = por %p86, %p87
      %p89 = scmp.le.s32.totalorder 1, %s13
      %p90 = scmp.lt.s32.totalorder %s13, 3
      %p91 = pnand %p89, %p90
      %p92 = pneg %p91
      // Predicated region
      $region9: #{tpu_custom_call.1} parent=5 // pred_check
        _
      $region10: #{tpu_custom_call.1} parent=5 // pred_check_branch
        %94 = sbr.rel (%p91) target = $region12
      $region11: #{tpu_custom_call.1} parent=5 // pred_region
        %s95 = ssub.s32 %s13, 1
      $region12: #{tpu_custom_call.1} parent=5 // pred_fallthru
        _
      %p96 = scmp.lt.s32.totalorder %s13, 2
      // Predicated region
      $region13: #{tpu_custom_call.1} parent=5 // pred_check
        %p97 = pneg %p96
      $region14: #{tpu_custom_call.1} parent=5 // pred_check_branch
        %99 = sbr.rel (%p97) target = $region16
      $region15: #{tpu_custom_call.1} parent=5 // pred_region
        // Predicated region
        $region17: #{tpu_custom_call.1} parent=15 // pred_check
          %p100 = pneg %p47
        $region18: #{tpu_custom_call.1} parent=15 // pred_check_branch
          %102 = sbr.rel (%p100) target = $region20
        $region19: #{tpu_custom_call.1} parent=15 // pred_region
          %s103 = sand.u32 %s37, 1
          %s104 = scalar_lea.sflag [#allocation3], %s103
          %s105 = sand.u32 %s37, 1
          %s106 = smul.addr %s105, 8
          %s107 = scalar_lea.vmem [#allocation2], %s106
          %s109 = ssub.s32 128, 128
          %110 = vsyncadd %s104, %s109
          %s111 = smul.addr %s21, 2
          %s112 = smul.addr %s20, 4
          %s113 = sadd.s32 %s111, %s112
          %s114 = smul.addr %s113, 32
          %s115 = scalar_lea.hbm %s0, %s114
          %s116 = sshll.u32 %s107, 4
          %s117 = int_to_ptr.vmem [resolvable:$true] %s116
          %122 = dma.hbm_to_vmem [thread:$0]  %s115, 128, %s117, %s104, 64, 64, 4
        $region20: #{tpu_custom_call.1} parent=15 // pred_fallthru
          _
      $region16: #{tpu_custom_call.1} parent=5 // pred_fallthru
        _
      %p123 = scmp.le.s32.totalorder 1, %s13
      %p124 = scmp.lt.s32.totalorder %s13, 3
      %p125 = pnand %p123, %p124
      %p126 = pneg %p125
      // Predicated region
      $region21: #{tpu_custom_call.1} parent=5 // pred_check
        _
      $region22: #{tpu_custom_call.1} parent=5 // pred_check_branch
        %128 = sbr.rel (%p125) target = $region24
      $region23: #{tpu_custom_call.1} parent=5 // pred_region
        %s129 = ssub.s32 %s13, 1
        %s130 = sand.u32 %s40, 1
        %s131 = scalar_lea.sflag [#allocation3], %s130
        %s132 = sand.u32 %s40, 1
        %s133 = smul.addr %s132, 8
        %s134 = scalar_lea.vmem [#allocation2], %s133
        // Predicated region
        $region25: #{tpu_custom_call.1} parent=23 // pred_check
          %p135 = pneg %p53
        $region26: #{tpu_custom_call.1} parent=23 // pred_check_branch
          %137 = sbr.rel (%p135) target = $region28
        $region27: #{tpu_custom_call.1} parent=23 // pred_region
          %138 = dma.done %s131, 128
        $region28: #{tpu_custom_call.1} parent=23 // pred_fallthru
          _
        %s139 = sand.u32 %s40, 1
        %s140 = scalar_lea.sflag [#allocation3], %s139
        %s141 = sand.u32 %s40, 1
        %s142 = smul.addr %s141, 8
        %s143 = scalar_lea.vmem [#allocation2], %s142
        %p144 = pneg %p53
        %p145 = pneg %p50
        %p146 = pneg %p81
        %p147 = pneg %p78
        %s148 = sand.u32 %s68, 1
        %s149 = scalar_lea.sflag [#allocation4], %s148
        %s150 = sand.u32 %s68, 1
        %s151 = smul.addr %s150, 8
        %s152 = scalar_lea.vmem [#allocation5], %s151
        %v153 = vld [vmem:[%s134] sm:$0xf]
        %154 = vst [vmem:[%s152] sm:$0xf] %v153
        %s155 = scalar_lea.vmem %s134, 4 [#allocation2]
        %v156 = vld [vmem:[%s155] sm:$0xf]
        %157 = vst [vmem:[%s152 + $0x4] sm:$0xf] %v156
        %s158 = sand.u32 %s68, 1
        %s159 = scalar_lea.sflag [#allocation4], %s158
        %s160 = sand.u32 %s68, 1
        %s161 = smul.addr %s160, 8
        %s162 = scalar_lea.vmem [#allocation5], %s161
        // Predicated region
        $region29: #{tpu_custom_call.1} parent=23 // pred_check
          %p163 = pneg %p78
        $region30: #{tpu_custom_call.1} parent=23 // pred_check_branch
          %165 = sbr.rel (%p163) target = $region32
        $region31: #{tpu_custom_call.1} parent=23 // pred_region
          %s167 = ssub.s32 128, 128
          %168 = vsyncadd %s159, %s167
          %s169 = smul.addr %s23, 4
          %s170 = smul.addr %s22, 4
          %s171 = sadd.s32 %s169, %s170
          %s172 = smul.addr %s171, 32
          %s173 = scalar_lea.hbm %s1, %s172
          %s175 = sshll.u32 %s162, 4
          %s176 = int_to_ptr.vmem [resolvable:$true] %s175
          %178 = dma.vmem_to_hbm [thread:$0]  %s176, 128, %s173, %s159
        $region32: #{tpu_custom_call.1} parent=23 // pred_fallthru
          _
      $region24: #{tpu_custom_call.1} parent=5 // pred_fallthru
        _
      %p179 = scmp.le.s32.totalorder 2, %s13
      // Predicated region
      $region33: #{tpu_custom_call.1} parent=5 // pred_check
        %p180 = pneg %p179
      $region34: #{tpu_custom_call.1} parent=5 // pred_check_branch
        %182 = sbr.rel (%p180) target = $region36
      $region35: #{tpu_custom_call.1} parent=5 // pred_region
        %s183 = ssub.s32 %s13, 2
        // Predicated region
        $region37: #{tpu_custom_call.1} parent=35 // pred_check
          %p184 = pneg %p84
        $region38: #{tpu_custom_call.1} parent=35 // pred_check_branch
          %186 = sbr.rel (%p184) target = $region40
        $region39: #{tpu_custom_call.1} parent=35 // pred_region
          %s187 = sand.u32 %s69, 1
          %s188 = scalar_lea.sflag [#allocation4], %s187
          %s189 = sand.u32 %s69, 1
          %s190 = smul.addr %s189, 8
          %s191 = scalar_lea.vmem [#allocation5], %s190
          %192 = dma.done %s188, 128
        $region40: #{tpu_custom_call.1} parent=35 // pred_fallthru
          _
      $region36: #{tpu_custom_call.1} parent=5 // pred_fallthru
        _
    $region6: #{tpu_custom_call.1} parent=1 // loop_footer
      %s17 = sadd.s32 1, %s13
    $region7: #{tpu_custom_call.1} parent=1 // loop_footer_branch
      %12 = sbr.rel target = $region3
    $region8: #{tpu_custom_call.1} parent=1 // loop_exit
      _
    %193 = vsyncpa [#allocation3], 1
    %s194 = scalar_lea.sflag [#allocation3], 1
    %195 = vsyncpa %s194, 1
    %196 = vsyncpa [#allocation4], 1
    %s197 = scalar_lea.sflag [#allocation4], 1
    %198 = vsyncpa %s197, 1

</llo_original>
